<compile_context>
chip_gen: v5e
topology: v5e:2x2
jax: 0.10.0
libtpu: 0.0.40
codegen_flags: <defaults>
</compile_context>

<pallas_src>
import numpy as np
import jax
import jax.numpy as jnp
from jax import lax
from jax.experimental import pallas as pl
from jax.experimental.pallas import tpu as pltpu


# ------------------------------ in-kernel helpers ------------------------------

def _shift_lanes(x, off, n):
    """y[..., q] = x[..., (q + off) % n] for a static offset (lane rotation)."""
    k = off % n
    if k == 0:
        return x
    return jnp.concatenate([x[..., k:], x[..., :k]], axis=-1)


def _make_kernel(Wo, S1p):
    """Fused down-conv -> ReLU -> parity-decomposed conv-transpose -> BN affine."""
    W1 = Wo + 1  # row stride of the flattened extended (padded-by-1) output grid

    def kernel(xps_ref, mask_ref, wd_ref, wu_ref, shift_ref, o_ref):
        # xps_ref  : (1, 4*C, S1p) f32  parity planes of padded x, rows = (parity, c)
        # mask_ref : (1, S1p)      f32  1.0 on valid extended-grid positions
        # wd_ref   : (ni, 16*C)    bf16 down weights, cols ordered (dy, dx, ry, rx, c)
        # wu_ref   : (4, nf, 4*ni) bf16 per-parity up weights (BN scale folded in)
        # shift_ref: (nf, 1)       f32  BN shift
        # o_ref    : (1, 4, nf, S1p) f32 per-parity up outputs on the extended grid
        a = xps_ref[0]                                   # (4C, S1p)
        a = jnp.where(a >= 0, a, 0.2 * a)                # LeakyReLU(0.2), once per element

        # ---- down conv as one GEMM: h = Wd @ Pd, K = 16*C (in-kernel "im2col")
        pieces = [_shift_lanes(a, dy * W1 + dx, S1p)
                  for dy in range(2) for dx in range(2)]
        p_d = jnp.concatenate(pieces, axis=0).astype(jnp.bfloat16)         # (16C, S1p)
        h = jnp.dot(wd_ref[...], p_d, preferred_element_type=jnp.float32)  # (ni, S1p)

        # ReLU once on h; the mask zeroes the invalid extended-grid positions, which
        # doubles as the zero halo the conv-transpose needs.
        h = jnp.maximum(h, 0.0) * mask_ref[...]

        # ---- conv-transpose, parity-decomposed: 4 GEMMs with K = 4*ni (no zeros)
        shift = shift_ref[...]                           # (nf, 1) broadcast over lanes
        for r in range(2):
            for s in range(2):
                taps = [_shift_lanes(h, (r - 1 + ty) * W1 + (s - 1 + tx), S1p)
                        for ty in range(2) for tx in range(2)]
                p_u = jnp.concatenate(taps, axis=0).astype(jnp.bfloat16)   # (4ni, S1p)
                u = jnp.dot(wu_ref[2 * r + s], p_u,
                            preferred_element_type=jnp.float32)            # (nf, S1p)
                o_ref[0, 2 * r + s] = u + shift          # lane-dense store (S1p % 128 == 0)

    return kernel


# ----------------------------------- wrapper ------------------------------------

def unet_block_innermost(x, params, eps=1e-5):
    """Innermost UnetBlock forward: cat([x, up(down(x))], channel dim)."""
    w_down, w_up = params["w_down"], params["w_up"]
    gamma, beta = params["gamma"], params["beta"]
    rmean, rvar = params["rmean"], params["rvar"]

    N, C, H, W = x.shape
    ni = w_down.shape[0]
    nf = w_up.shape[1]
    Ho, Wo = H // 2, W // 2
    S1 = (Ho + 1) * (Wo + 1)                        # flattened extended output grid
    S1p = max(128, ((S1 + 127) // 128) * 128)       # lane-dense padding

    # --- input prep: pad by 1, split into the 4 stride-2 parity planes, flatten
    #     spatial (single pass over x, same total size as x_pad; no im2col in HBM).
    x_pad = jnp.pad(x, ((0, 0), (0, 0), (1, 1), (1, 1)))
    planes = [x_pad[:, :, ry::2, rx::2] for ry in range(2) for rx in range(2)]
    xps = jnp.stack(planes, axis=1).reshape(N, 4 * C, S1)     # rows = (parity, c)
    xps = jnp.pad(xps, ((0, 0), (0, 0), (0, S1p - S1)))

    # --- validity mask on the extended grid (also the conv-transpose zero halo)
    q = np.arange(S1p)
    valid = ((q % (Wo + 1)) < Wo) & (q < Ho * (Wo + 1))
    mask = jnp.asarray(valid.astype(np.float32)).reshape(1, S1p)

    # --- down weights: columns ordered (dy, dx, ry, rx, c) to match in-kernel Pd
    wd_mat = (w_down.reshape(ni, C, 2, 2, 2, 2)     # (o, c, dy, ry, dx, rx)
              .transpose(0, 2, 4, 3, 5, 1)          # (o, dy, dx, ry, rx, c)
              .reshape(ni, 16 * C)
              .astype(jnp.bfloat16))

    # --- up weights: 2x2 sub-kernel per output parity, BN scale folded in
    scale = gamma / jnp.sqrt(rvar + eps)                                # (nf,)
    shift = (beta - rmean * scale).reshape(nf, 1).astype(jnp.float32)   # (nf, 1)
    wu_blocks = []
    for r in range(2):
        for s in range(2):
            cols = []
            for ty in range(2):
                for tx in range(2):
                    ky = 3 - r if ty == 0 else 1 - r
                    kx = 3 - s if tx == 0 else 1 - s
                    cols.append(w_up[:, :, ky, kx].T)                   # (nf, ni)
            wu_blocks.append(jnp.concatenate(cols, axis=1) * scale[:, None])
    wu_mat = jnp.stack(wu_blocks, axis=0).astype(jnp.bfloat16)          # (4, nf, 4*ni)

    out = pl.pallas_call(
        _make_kernel(Wo, S1p),
        out_shape=jax.ShapeDtypeStruct((N, 4, nf, S1p), jnp.float32),
        grid=(N,),
        in_specs=[
            pl.BlockSpec((1, 4 * C, S1p), lambda b: (b, 0, 0)),
            pl.BlockSpec((1, S1p), lambda b: (0, 0)),
            pl.BlockSpec((ni, 16 * C), lambda b: (0, 0)),
            pl.BlockSpec((4, nf, 4 * ni), lambda b: (0, 0, 0)),
            pl.BlockSpec((nf, 1), lambda b: (0, 0)),
        ],
        out_specs=pl.BlockSpec((1, 4, nf, S1p), lambda b: (b, 0, 0, 0)),
        compiler_params=pltpu.CompilerParams(
            dimension_semantics=("parallel",)),
    )(xps, mask, wd_mat, wu_mat, shift)

    # --- de-interleave the 4 output parities back to NCHW and concat with x
    u = out[:, :, :, :S1].reshape(N, 2, 2, nf, Ho + 1, Wo + 1)[:, :, :, :, :Ho, :Wo]
    y = u.transpose(0, 3, 4, 1, 5, 2).reshape(N, nf, H, W)
    return jnp.concatenate([x, y], axis=1)


# ------------------------- pure-JAX reference (for checking) ---------------------

def _reference(x, params, eps=1e-5):
    a = jnp.where(x >= 0, x, 0.2 * x)
    h = lax.conv_general_dilated(a, params["w_down"], (2, 2), ((1, 1), (1, 1)),
                                 dimension_numbers=("NCHW", "OIHW", "NCHW"),
                                 precision=jax.lax.Precision.HIGHEST)
    b = jnp.maximum(h, 0.0)
    w_up_conv = jnp.flip(params["w_up"], axis=(2, 3)).transpose(1, 0, 2, 3)
    u = lax.conv_general_dilated(b, w_up_conv, (1, 1), ((2, 2), (2, 2)),
                                 lhs_dilation=(2, 2),
                                 dimension_numbers=("NCHW", "OIHW", "NCHW"),
                                 precision=jax.lax.Precision.HIGHEST)
    scale = (params["gamma"] / jnp.sqrt(params["rvar"] + eps))[None, :, None, None]
    y = (u - params["rmean"][None, :, None, None]) * scale + params["beta"][None, :, None, None]
    return jnp.concatenate([x, y], axis=1)


# ------------------------------------- main --------------------------------------

if __name__ == "__main__":
    # Small shapes consistent with an innermost UnetBlock: nf = input_c = 4, ni = 8.
    N, nf, H, W = 2, 4, 16, 16
    ni = 8

    key = jax.random.PRNGKey(0)
    k1, k2, k3, k4, k5, k6, k7 = jax.random.split(key, 7)

    x = jax.random.normal(k1, (N, nf, H, W), jnp.float32)

    # TODO(synk): BatchNorm2d is implemented in eval mode (running stats); PyTorch's
    # default train-mode batch statistics are not modeled.
    params = {
        "w_down": 0.1 * jax.random.normal(k2, (ni, nf, 4, 4), jnp.float32),  # Conv2d (O,I,kH,kW)
        "w_up":   0.1 * jax.random.normal(k3, (ni, nf, 4, 4), jnp.float32),  # ConvTranspose2d (I,O,kH,kW)
        "gamma":  1.0 + 0.1 * jax.random.normal(k4, (nf,), jnp.float32),
        "beta":   0.1 * jax.random.normal(k5, (nf,), jnp.float32),
        "rmean":  0.1 * jax.random.normal(k6, (nf,), jnp.float32),
        "rvar":   jax.random.uniform(k7, (nf,), jnp.float32, 0.5, 1.5),
    }

    fwd = jax.jit(unet_block_innermost)
    out = jax.block_until_ready(fwd(x, params))
    ref = jax.block_until_ready(_reference(x, params))

    assert out.shape == (N, 2 * nf, H, W), out.shape
    err = float(jnp.max(jnp.abs(out - ref)))
    # bf16 MXU operands with f32 accumulation -> tolerance sized for bf16 rounding.
    assert err < 3e-2, err

    print("KERNEL_OK")
</pallas_src>

<mosaic_0001>
module attributes {stable_mosaic.version = 11 : i64} {
  func.func @kernel(%arg0: i32, %arg1: memref<1x16x128xf32, #tpu.memory_space<vmem>>, %arg2: memref<1x128xf32, #tpu.memory_space<vmem>>, %arg3: memref<8x64xbf16, #tpu.memory_space<vmem>>, %arg4: memref<4x4x32xbf16, #tpu.memory_space<vmem>>, %arg5: memref<4x1xf32, #tpu.memory_space<vmem>>, %arg6: memref<1x4x4x128xf32, #tpu.memory_space<vmem>>) attributes {dimension_semantics = [#tpu.dimension_semantics<parallel>], iteration_bounds = array<i64: 2>, scalar_prefetch = 0 : i64, scratch_operands = 0 : i64, tpu.core_type = #tpu.core_type<tc>, window_params = [{transform_indices = @transform_0, window_bounds = array<i64: 1, 16, 128>}, {pipeline_mode = #tpu.pipeline_mode<synchronous>, transform_indices = @transform_1, window_bounds = array<i64: 1, 128>}, {pipeline_mode = #tpu.pipeline_mode<synchronous>, transform_indices = @transform_2, window_bounds = array<i64: 8, 64>}, {pipeline_mode = #tpu.pipeline_mode<synchronous>, transform_indices = @transform_3, window_bounds = array<i64: 4, 4, 32>}, {pipeline_mode = #tpu.pipeline_mode<synchronous>, transform_indices = @transform_4, window_bounds = array<i64: 4, 1>}, {transform_indices = @transform_5, window_bounds = array<i64: 1, 4, 4, 128>}]} {
    %c0 = arith.constant 0 : index
    %c0_0 = arith.constant 0 : index
    %c0_1 = arith.constant 0 : index
    %0 = vector.load %arg1[%c0, %c0_0, %c0_1] : memref<1x16x128xf32, #tpu.memory_space<vmem>>, vector<1x16x128xf32>
    %1 = vector.shape_cast %0 : vector<1x16x128xf32> to vector<16x128xf32>
    %cst = arith.constant 0.000000e+00 : f32
    %2 = vector.broadcast %cst : f32 to vector<16x128xf32>
    %3 = arith.cmpf oge, %1, %2 : vector<16x128xf32>
    %cst_2 = arith.constant 2.000000e-01 : f32
    %4 = vector.broadcast %cst_2 : f32 to vector<16x128xf32>
    %5 = arith.mulf %4, %1 : vector<16x128xf32>
    %6 = arith.select %3, %1, %5 : vector<16x128xi1>, vector<16x128xf32>
    %7 = vector.extract_strided_slice %6 {offsets = [0, 1], sizes = [16, 127], strides = [1, 1]} : vector<16x128xf32> to vector<16x127xf32>
    %8 = vector.extract_strided_slice %6 {offsets = [0, 0], sizes = [16, 1], strides = [1, 1]} : vector<16x128xf32> to vector<16x1xf32>
    %9 = tpu.concatenate %7, %8 in 1 : vector<16x127xf32>, vector<16x1xf32> -> vector<16x128xf32>
    %10 = vector.extract_strided_slice %6 {offsets = [0, 9], sizes = [16, 119], strides = [1, 1]} : vector<16x128xf32> to vector<16x119xf32>
    %11 = vector.extract_strided_slice %6 {offsets = [0, 0], sizes = [16, 9], strides = [1, 1]} : vector<16x128xf32> to vector<16x9xf32>
    %12 = tpu.concatenate %10, %11 in 1 : vector<16x119xf32>, vector<16x9xf32> -> vector<16x128xf32>
    %13 = vector.extract_strided_slice %6 {offsets = [0, 10], sizes = [16, 118], strides = [1, 1]} : vector<16x128xf32> to vector<16x118xf32>
    %14 = vector.extract_strided_slice %6 {offsets = [0, 0], sizes = [16, 10], strides = [1, 1]} : vector<16x128xf32> to vector<16x10xf32>
    %15 = tpu.concatenate %13, %14 in 1 : vector<16x118xf32>, vector<16x10xf32> -> vector<16x128xf32>
    %16 = tpu.concatenate %6, %9, %12, %15 in 0 : vector<16x128xf32>, vector<16x128xf32>, vector<16x128xf32>, vector<16x128xf32> -> vector<64x128xf32>
    %17 = arith.truncf %16 : vector<64x128xf32> to vector<64x128xbf16>
    %c0_3 = arith.constant 0 : index
    %c0_4 = arith.constant 0 : index
    %18 = vector.load %arg3[%c0_3, %c0_4] : memref<8x64xbf16, #tpu.memory_space<vmem>>, vector<8x64xbf16>
    %cst_5 = arith.constant dense<0.000000e+00> : vector<8x128xf32>
    %19 = tpu.matmul %18, %17, %cst_5 {dimension_numbers = #tpu.dot_dimension_numbers<[1], [0], [0], [1], [0, 0, 1, 1], [], []>} : vector<8x64xbf16>, vector<64x128xbf16>, vector<8x128xf32> -> vector<8x128xf32>
    %cst_6 = arith.constant 0.000000e+00 : f32
    %20 = vector.broadcast %cst_6 : f32 to vector<8x128xf32>
    %21 = arith.maximumf %19, %20 : vector<8x128xf32>
    %c0_7 = arith.constant 0 : index
    %c0_8 = arith.constant 0 : index
    %22 = vector.load %arg2[%c0_7, %c0_8] : memref<1x128xf32, #tpu.memory_space<vmem>>, vector<1x128xf32>
    %23 = vector.broadcast %22 : vector<1x128xf32> to vector<8x128xf32>
    %24 = arith.mulf %21, %23 : vector<8x128xf32>
    %c0_9 = arith.constant 0 : index
    %c0_10 = arith.constant 0 : index
    %25 = vector.load %arg5[%c0_9, %c0_10] : memref<4x1xf32, #tpu.memory_space<vmem>>, vector<4x1xf32>
    %26 = vector.extract_strided_slice %24 {offsets = [0, 118], sizes = [8, 10], strides = [1, 1]} : vector<8x128xf32> to vector<8x10xf32>
    %27 = vector.extract_strided_slice %24 {offsets = [0, 0], sizes = [8, 118], strides = [1, 1]} : vector<8x128xf32> to vector<8x118xf32>
    %28 = tpu.concatenate %26, %27 in 1 : vector<8x10xf32>, vector<8x118xf32> -> vector<8x128xf32>
    %29 = vector.extract_strided_slice %24 {offsets = [0, 119], sizes = [8, 9], strides = [1, 1]} : vector<8x128xf32> to vector<8x9xf32>
    %30 = vector.extract_strided_slice %24 {offsets = [0, 0], sizes = [8, 119], strides = [1, 1]} : vector<8x128xf32> to vector<8x119xf32>
    %31 = tpu.concatenate %29, %30 in 1 : vector<8x9xf32>, vector<8x119xf32> -> vector<8x128xf32>
    %32 = vector.extract_strided_slice %24 {offsets = [0, 127], sizes = [8, 1], strides = [1, 1]} : vector<8x128xf32> to vector<8x1xf32>
    %33 = vector.extract_strided_slice %24 {offsets = [0, 0], sizes = [8, 127], strides = [1, 1]} : vector<8x128xf32> to vector<8x127xf32>
    %34 = tpu.concatenate %32, %33 in 1 : vector<8x1xf32>, vector<8x127xf32> -> vector<8x128xf32>
    %35 = tpu.concatenate %28, %31, %34, %24 in 0 : vector<8x128xf32>, vector<8x128xf32>, vector<8x128xf32>, vector<8x128xf32> -> vector<32x128xf32>
    %36 = arith.truncf %35 : vector<32x128xf32> to vector<32x128xbf16>
    %c0_11 = arith.constant 0 : index
    %c0_12 = arith.constant 0 : index
    %c0_13 = arith.constant 0 : index
    %37 = vector.load %arg4[%c0_11, %c0_12, %c0_13] : memref<4x4x32xbf16, #tpu.memory_space<vmem>>, vector<1x4x32xbf16>
    %38 = vector.shape_cast %37 : vector<1x4x32xbf16> to vector<4x32xbf16>
    %cst_14 = arith.constant dense<0.000000e+00> : vector<4x128xf32>
    %39 = tpu.matmul %38, %36, %cst_14 {dimension_numbers = #tpu.dot_dimension_numbers<[1], [0], [0], [1], [0, 0, 1, 1], [], []>} : vector<4x32xbf16>, vector<32x128xbf16>, vector<4x128xf32> -> vector<4x128xf32>
    %40 = vector.broadcast %25 : vector<4x1xf32> to vector<4x128xf32>
    %41 = arith.addf %39, %40 : vector<4x128xf32>
    %c0_15 = arith.constant 0 : index
    %c0_16 = arith.constant 0 : index
    %c0_17 = arith.constant 0 : index
    %c0_18 = arith.constant 0 : index
    %42 = vector.load %arg6[%c0_15, %c0_16, %c0_17, %c0_18] : memref<1x4x4x128xf32, #tpu.memory_space<vmem>>, vector<1x1x4x128xf32>
    %43 = vector.shape_cast %42 : vector<1x1x4x128xf32> to vector<4x128xf32>
    %44 = vector.shape_cast %41 : vector<4x128xf32> to vector<1x1x4x128xf32>
    tpu.vector_store %arg6[%c0_15, %c0_16, %c0_17, %c0_18], %44 {strides = array<i32>} : memref<1x4x4x128xf32, #tpu.memory_space<vmem>>, vector<1x1x4x128xf32>,
    %45 = vector.extract_strided_slice %24 {offsets = [0, 119], sizes = [8, 9], strides = [1, 1]} : vector<8x128xf32> to vector<8x9xf32>
    %46 = vector.extract_strided_slice %24 {offsets = [0, 0], sizes = [8, 119], strides = [1, 1]} : vector<8x128xf32> to vector<8x119xf32>
    %47 = tpu.concatenate %45, %46 in 1 : vector<8x9xf32>, vector<8x119xf32> -> vector<8x128xf32>
    %48 = vector.extract_strided_slice %24 {offsets = [0, 120], sizes = [8, 8], strides = [1, 1]} : vector<8x128xf32> to vector<8x8xf32>
    %49 = vector.extract_strided_slice %24 {offsets = [0, 0], sizes = [8, 120], strides = [1, 1]} : vector<8x128xf32> to vector<8x120xf32>
    %50 = tpu.concatenate %48, %49 in 1 : vector<8x8xf32>, vector<8x120xf32> -> vector<8x128xf32>
    %51 = vector.extract_strided_slice %24 {offsets = [0, 1], sizes = [8, 127], strides = [1, 1]} : vector<8x128xf32> to vector<8x127xf32>
    %52 = vector.extract_strided_slice %24 {offsets = [0, 0], sizes = [8, 1], strides = [1, 1]} : vector<8x128xf32> to vector<8x1xf32>
    %53 = tpu.concatenate %51, %52 in 1 : vector<8x127xf32>, vector<8x1xf32> -> vector<8x128xf32>
    %54 = tpu.concatenate %47, %50, %24, %53 in 0 : vector<8x128xf32>, vector<8x128xf32>, vector<8x128xf32>, vector<8x128xf32> -> vector<32x128xf32>
    %55 = arith.truncf %54 : vector<32x128xf32> to vector<32x128xbf16>
    %c1 = arith.constant 1 : index
    %c0_19 = arith.constant 0 : index
    %c0_20 = arith.constant 0 : index
    %56 = vector.load %arg4[%c1, %c0_19, %c0_20] : memref<4x4x32xbf16, #tpu.memory_space<vmem>>, vector<1x4x32xbf16>
    %57 = vector.shape_cast %56 : vector<1x4x32xbf16> to vector<4x32xbf16>
    %cst_21 = arith.constant dense<0.000000e+00> : vector<4x128xf32>
    %58 = tpu.matmul %57, %55, %cst_21 {dimension_numbers = #tpu.dot_dimension_numbers<[1], [0], [0], [1], [0, 0, 1, 1], [], []>} : vector<4x32xbf16>, vector<32x128xbf16>, vector<4x128xf32> -> vector<4x128xf32>
    %59 = vector.broadcast %25 : vector<4x1xf32> to vector<4x128xf32>
    %60 = arith.addf %58, %59 : vector<4x128xf32>
    %c0_22 = arith.constant 0 : index
    %c1_23 = arith.constant 1 : index
    %c0_24 = arith.constant 0 : index
    %c0_25 = arith.constant 0 : index
    %61 = vector.load %arg6[%c0_22, %c1_23, %c0_24, %c0_25] : memref<1x4x4x128xf32, #tpu.memory_space<vmem>>, vector<1x1x4x128xf32>
    %62 = vector.shape_cast %61 : vector<1x1x4x128xf32> to vector<4x128xf32>
    %63 = vector.shape_cast %60 : vector<4x128xf32> to vector<1x1x4x128xf32>
    tpu.vector_store %arg6[%c0_22, %c1_23, %c0_24, %c0_25], %63 {strides = array<i32>} : memref<1x4x4x128xf32, #tpu.memory_space<vmem>>, vector<1x1x4x128xf32>,
    %64 = vector.extract_strided_slice %24 {offsets = [0, 127], sizes = [8, 1], strides = [1, 1]} : vector<8x128xf32> to vector<8x1xf32>
    %65 = vector.extract_strided_slice %24 {offsets = [0, 0], sizes = [8, 127], strides = [1, 1]} : vector<8x128xf32> to vector<8x127xf32>
    %66 = tpu.concatenate %64, %65 in 1 : vector<8x1xf32>, vector<8x127xf32> -> vector<8x128xf32>
    %67 = vector.extract_strided_slice %24 {offsets = [0, 8], sizes = [8, 120], strides = [1, 1]} : vector<8x128xf32> to vector<8x120xf32>
    %68 = vector.extract_strided_slice %24 {offsets = [0, 0], sizes = [8, 8], strides = [1, 1]} : vector<8x128xf32> to vector<8x8xf32>
    %69 = tpu.concatenate %67, %68 in 1 : vector<8x120xf32>, vector<8x8xf32> -> vector<8x128xf32>
    %70 = vector.extract_strided_slice %24 {offsets = [0, 9], sizes = [8, 119], strides = [1, 1]} : vector<8x128xf32> to vector<8x119xf32>
    %71 = vector.extract_strided_slice %24 {offsets = [0, 0], sizes = [8, 9], strides = [1, 1]} : vector<8x128xf32> to vector<8x9xf32>
    %72 = tpu.concatenate %70, %71 in 1 : vector<8x119xf32>, vector<8x9xf32> -> vector<8x128xf32>
    %73 = tpu.concatenate %66, %24, %69, %72 in 0 : vector<8x128xf32>, vector<8x128xf32>, vector<8x128xf32>, vector<8x128xf32> -> vector<32x128xf32>
    %74 = arith.truncf %73 : vector<32x128xf32> to vector<32x128xbf16>
    %c2 = arith.constant 2 : index
    %c0_26 = arith.constant 0 : index
    %c0_27 = arith.constant 0 : index
    %75 = vector.load %arg4[%c2, %c0_26, %c0_27] : memref<4x4x32xbf16, #tpu.memory_space<vmem>>, vector<1x4x32xbf16>
    %76 = vector.shape_cast %75 : vector<1x4x32xbf16> to vector<4x32xbf16>
    %cst_28 = arith.constant dense<0.000000e+00> : vector<4x128xf32>
    %77 = tpu.matmul %76, %74, %cst_28 {dimension_numbers = #tpu.dot_dimension_numbers<[1], [0], [0], [1], [0, 0, 1, 1], [], []>} : vector<4x32xbf16>, vector<32x128xbf16>, vector<4x128xf32> -> vector<4x128xf32>
    %78 = vector.broadcast %25 : vector<4x1xf32> to vector<4x128xf32>
    %79 = arith.addf %77, %78 : vector<4x128xf32>
    %c0_29 = arith.constant 0 : index
    %c2_30 = arith.constant 2 : index
    %c0_31 = arith.constant 0 : index
    %c0_32 = arith.constant 0 : index
    %80 = vector.load %arg6[%c0_29, %c2_30, %c0_31, %c0_32] : memref<1x4x4x128xf32, #tpu.memory_space<vmem>>, vector<1x1x4x128xf32>
    %81 = vector.shape_cast %80 : vector<1x1x4x128xf32> to vector<4x128xf32>
    %82 = vector.shape_cast %79 : vector<4x128xf32> to vector<1x1x4x128xf32>
    tpu.vector_store %arg6[%c0_29, %c2_30, %c0_31, %c0_32], %82 {strides = array<i32>} : memref<1x4x4x128xf32, #tpu.memory_space<vmem>>, vector<1x1x4x128xf32>,
    %83 = vector.extract_strided_slice %24 {offsets = [0, 1], sizes = [8, 127], strides = [1, 1]} : vector<8x128xf32> to vector<8x127xf32>
    %84 = vector.extract_strided_slice %24 {offsets = [0, 0], sizes = [8, 1], strides = [1, 1]} : vector<8x128xf32> to vector<8x1xf32>
    %85 = tpu.concatenate %83, %84 in 1 : vector<8x127xf32>, vector<8x1xf32> -> vector<8x128xf32>
    %86 = vector.extract_strided_slice %24 {offsets = [0, 9], sizes = [8, 119], strides = [1, 1]} : vector<8x128xf32> to vector<8x119xf32>
    %87 = vector.extract_strided_slice %24 {offsets = [0, 0], sizes = [8, 9], strides = [1, 1]} : vector<8x128xf32> to vector<8x9xf32>
    %88 = tpu.concatenate %86, %87 in 1 : vector<8x119xf32>, vector<8x9xf32> -> vector<8x128xf32>
    %89 = vector.extract_strided_slice %24 {offsets = [0, 10], sizes = [8, 118], strides = [1, 1]} : vector<8x128xf32> to vector<8x118xf32>
    %90 = vector.extract_strided_slice %24 {offsets = [0, 0], sizes = [8, 10], strides = [1, 1]} : vector<8x128xf32> to vector<8x10xf32>
    %91 = tpu.concatenate %89, %90 in 1 : vector<8x118xf32>, vector<8x10xf32> -> vector<8x128xf32>
    %92 = tpu.concatenate %24, %85, %88, %91 in 0 : vector<8x128xf32>, vector<8x128xf32>, vector<8x128xf32>, vector<8x128xf32> -> vector<32x128xf32>
    %93 = arith.truncf %92 : vector<32x128xf32> to vector<32x128xbf16>
    %c3 = arith.constant 3 : index
    %c0_33 = arith.constant 0 : index
    %c0_34 = arith.constant 0 : index
    %94 = vector.load %arg4[%c3, %c0_33, %c0_34] : memref<4x4x32xbf16, #tpu.memory_space<vmem>>, vector<1x4x32xbf16>
    %95 = vector.shape_cast %94 : vector<1x4x32xbf16> to vector<4x32xbf16>
    %cst_35 = arith.constant dense<0.000000e+00> : vector<4x128xf32>
    %96 = tpu.matmul %95, %93, %cst_35 {dimension_numbers = #tpu.dot_dimension_numbers<[1], [0], [0], [1], [0, 0, 1, 1], [], []>} : vector<4x32xbf16>, vector<32x128xbf16>, vector<4x128xf32> -> vector<4x128xf32>
    %97 = vector.broadcast %25 : vector<4x1xf32> to vector<4x128xf32>
    %98 = arith.addf %96, %97 : vector<4x128xf32>
    %c0_36 = arith.constant 0 : index
    %c3_37 = arith.constant 3 : index
    %c0_38 = arith.constant 0 : index
    %c0_39 = arith.constant 0 : index
    %99 = vector.load %arg6[%c0_36, %c3_37, %c0_38, %c0_39] : memref<1x4x4x128xf32, #tpu.memory_space<vmem>>, vector<1x1x4x128xf32>
    %100 = vector.shape_cast %99 : vector<1x1x4x128xf32> to vector<4x128xf32>
    %101 = vector.shape_cast %98 : vector<4x128xf32> to vector<1x1x4x128xf32>
    tpu.vector_store %arg6[%c0_36, %c3_37, %c0_38, %c0_39], %101 {strides = array<i32>} : memref<1x4x4x128xf32, #tpu.memory_space<vmem>>, vector<1x1x4x128xf32>,
    return
  }
  func.func @transform_0(%arg0: i32) -> (i32, i32, i32) {
    %c0_i32 = arith.constant 0 : i32
    %c0_i32_0 = arith.constant 0 : i32
    %c0_i32_1 = arith.constant 0 : i32
    return %arg0, %c0_i32, %c0_i32_0 : i32, i32, i32
  }
  func.func @transform_1(%arg0: i32) -> (i32, i32) {
    %c0_i32 = arith.constant 0 : i32
    %c0_i32_0 = arith.constant 0 : i32
    %c0_i32_1 = arith.constant 0 : i32
    return %c0_i32, %c0_i32_0 : i32, i32
  }
  func.func @transform_2(%arg0: i32) -> (i32, i32) {
    %c0_i32 = arith.constant 0 : i32
    %c0_i32_0 = arith.constant 0 : i32
    %c0_i32_1 = arith.constant 0 : i32
    return %c0_i32, %c0_i32_0 : i32, i32
  }
  func.func @transform_3(%arg0: i32) -> (i32, i32, i32) {
    %c0_i32 = arith.constant 0 : i32
    %c0_i32_0 = arith.constant 0 : i32
    %c0_i32_1 = arith.constant 0 : i32
    %c0_i32_2 = arith.constant 0 : i32
    return %c0_i32, %c0_i32_0, %c0_i32_1 : i32, i32, i32
  }
  func.func @transform_4(%arg0: i32) -> (i32, i32) {
    %c0_i32 = arith.constant 0 : i32
    %c0_i32_0 = arith.constant 0 : i32
    %c0_i32_1 = arith.constant 0 : i32
    return %c0_i32, %c0_i32_0 : i32, i32
  }
  func.func @transform_5(%arg0: i32) -> (i32, i32, i32, i32) {
    %c0_i32 = arith.constant 0 : i32
    %c0_i32_0 = arith.constant 0 : i32
    %c0_i32_1 = arith.constant 0 : i32
    %c0_i32_2 = arith.constant 0 : i32
    return %arg0, %c0_i32, %c0_i32_0, %c0_i32_1 : i32, i32, i32, i32
  }
}

</mosaic_0001>

<llo_original>
// kernel: unet_block_innermost.1
$region0: #{unet_block_innermost.1}
  #allocation0 [shape = 'u32[]', space=smem, size = 0x4, offset = 0x4, fixed_abs, tag = 'smem constant byte address 0x4 - core index']
  #allocation1 [shape = 'u32[72,128]{1,0:T(1,128)}', space=vmem, size = 0x9000, scoped, tag = 'internal scratch']
  %s0 = inlined_call_operand.vmem [shape: f32[2,16,128], index: 0, kind: input, shape index: {}]
  %s1 = inlined_call_operand.vmem [shape: f32[1,128], index: 1, kind: input, shape index: {}]
  %s2 = inlined_call_operand.vmem [shape: bf16[8,64], index: 2, kind: input, shape index: {}]
  %s3 = inlined_call_operand.vmem [shape: bf16[4,4,32], index: 3, kind: input, shape index: {}]
  %s4 = inlined_call_operand.vmem [shape: f32[4,1], index: 4, kind: input, shape index: {}]
  %s5 = inlined_call_operand.vmem [shape: f32[2,4,4,128], index: 5, kind: output, shape index: {}]
  %s6 = sld [smem:[#allocation0]]
  $region53: #{unet_block_innermost.1} parent=0
    _
  %s8 = ssub.s32 1, %s6
  %s9 = scalar_select 0, %s8, %s6
  loop: start=0, step=1, limit=4
  $region2: #{unet_block_innermost.1} parent=0 // loop_pre_header
    _
  $region3: #{unet_block_innermost.1} parent=0 // loop_header
    %s11 = sphi 0, %s15
    %p12 = scmp.ge.s32.totalorder %s11, 4
    %s21 = sphi 0, %s23
    %s24 = sphi 0, %s21
    %s25 = sphi 0, %s24
    %s41 = sphi 0, %s25
    %s45 = sphi 0, %s45
    %s47 = sphi 0, %s45
    %s48 = sphi 0, %s47
    %s62 = sphi 0, %s48
    %s66 = sphi 0, %s66
    %s68 = sphi 0, %s66
    %s69 = sphi 0, %s68
    %s83 = sphi 0, %s69
    %s87 = sphi 0, %s87
    %s89 = sphi 0, %s87
    %s90 = sphi 0, %s89
    %s104 = sphi 0, %s90
    %s108 = sphi 0, %s108
    %s110 = sphi 0, %s108
    %s111 = sphi 0, %s110
    %s125 = sphi 0, %s111
    %s131 = sphi 0, %s133
    %s134 = sphi 0, %s131
    %s135 = sphi 0, %s134
    %s151 = sphi 0, %s135
  $region4: #{unet_block_innermost.1} parent=0 // loop_header_branch
    %14 = sbr.rel (%p12) target = $region8
  $region5: #{unet_block_innermost.1} parent=0 // loop_body
    %s16 = ssub.s32 %s11, 1
    %s17 = ssub.s32 %s11, 2
    %s18 = sadd.s32 %s11, 1
    %s19 = ssub.s32 %s11, %s18
    %p20 = scmp.eq.s32.totalorder %s19, 0
    %s22 = sadd.s32 %s21, 1
    %s23 = scalar_select %p20, %s21, %s22
    %p26 = pneg %p20
    %p27 = scmp.eq.s32.totalorder %s11, 1
    %p28 = por %p26, %p27
    %p29 = scmp.ne.s32.totalorder %s21, %s24
    %p30 = scmp.eq.s32.totalorder %s11, 0
    %p31 = por %p29, %p30
    %p32 = scmp.ne.s32.totalorder %s21, %s24
    %p33 = scmp.eq.s32.totalorder %s16, 1
    %p34 = por %p32, %p33
    %p35 = scmp.ne.s32.totalorder %s24, %s25
    %p36 = scmp.eq.s32.totalorder %s16, 0
    %p37 = por %p35, %p36
    %p38 = scmp.ne.s32.totalorder %s24, %s25
    %p39 = scmp.eq.s32.totalorder %s17, 1
    %p40 = por %p38, %p39
    %p42 = scmp.ne.s32.totalorder %s25, %s41
    %p43 = scmp.eq.s32.totalorder %s17, 0
    %p44 = por %p42, %p43
    %s46 = sadd.s32 %s45, 1
    %p49 = scmp.eq.s32.totalorder %s11, 1
    %p50 = scmp.ne.s32.totalorder %s45, %s47
    %p51 = scmp.eq.s32.totalorder %s11, 0
    %p52 = por %p50, %p51
    %p53 = scmp.ne.s32.totalorder %s45, %s47
    %p54 = scmp.eq.s32.totalorder %s16, 1
    %p55 = por %p53, %p54
    %p56 = scmp.ne.s32.totalorder %s47, %s48
    %p57 = scmp.eq.s32.totalorder %s16, 0
    %p58 = por %p56, %p57
    %p59 = scmp.ne.s32.totalorder %s47, %s48
    %p60 = scmp.eq.s32.totalorder %s17, 1
    %p61 = por %p59, %p60
    %p63 = scmp.ne.s32.totalorder %s48, %s62
    %p64 = scmp.eq.s32.totalorder %s17, 0
    %p65 = por %p63, %p64
    %s67 = sadd.s32 %s66, 1
    %p70 = scmp.eq.s32.totalorder %s11, 1
    %p71 = scmp.ne.s32.totalorder %s66, %s68
    %p72 = scmp.eq.s32.totalorder %s11, 0
    %p73 = por %p71, %p72
    %p74 = scmp.ne.s32.totalorder %s66, %s68
    %p75 = scmp.eq.s32.totalorder %s16, 1
    %p76 = por %p74, %p75
    %p77 = scmp.ne.s32.totalorder %s68, %s69
    %p78 = scmp.eq.s32.totalorder %s16, 0
    %p79 = por %p77, %p78
    %p80 = scmp.ne.s32.totalorder %s68, %s69
    %p81 = scmp.eq.s32.totalorder %s17, 1
    %p82 = por %p80, %p81
    %p84 = scmp.ne.s32.totalorder %s69, %s83
    %p85 = scmp.eq.s32.totalorder %s17, 0
    %p86 = por %p84, %p85
    %s88 = sadd.s32 %s87, 1
    %p91 = scmp.eq.s32.totalorder %s11, 1
    %p92 = scmp.ne.s32.totalorder %s87, %s89
    %p93 = scmp.eq.s32.totalorder %s11, 0
    %p94 = por %p92, %p93
    %p95 = scmp.ne.s32.totalorder %s87, %s89
    %p96 = scmp.eq.s32.totalorder %s16, 1
    %p97 = por %p95, %p96
    %p98 = scmp.ne.s32.totalorder %s89, %s90
    %p99 = scmp.eq.s32.totalorder %s16, 0
    %p100 = por %p98, %p99
    %p101 = scmp.ne.s32.totalorder %s89, %s90
    %p102 = scmp.eq.s32.totalorder %s17, 1
    %p103 = por %p101, %p102
    %p105 = scmp.ne.s32.totalorder %s90, %s104
    %p106 = scmp.eq.s32.totalorder %s17, 0
    %p107 = por %p105, %p106
    %s109 = sadd.s32 %s108, 1
    %p112 = scmp.eq.s32.totalorder %s11, 1
    %p113 = scmp.ne.s32.totalorder %s108, %s110
    %p114 = scmp.eq.s32.totalorder %s11, 0
    %p115 = por %p113, %p114
    %p116 = scmp.ne.s32.totalorder %s108, %s110
    %p117 = scmp.eq.s32.totalorder %s16, 1
    %p118 = por %p116, %p117
    %p119 = scmp.ne.s32.totalorder %s110, %s111
    %p120 = scmp.eq.s32.totalorder %s16, 0
    %p121 = por %p119, %p120
    %p122 = scmp.ne.s32.totalorder %s110, %s111
    %p123 = scmp.eq.s32.totalorder %s17, 1
    %p124 = por %p122, %p123
    %p126 = scmp.ne.s32.totalorder %s111, %s125
    %p127 = scmp.eq.s32.totalorder %s17, 0
    %p128 = por %p126, %p127
    %s129 = ssub.s32 %s11, %s18
    %p130 = scmp.eq.s32.totalorder %s129, 0
    %s132 = sadd.s32 %s131, 1
    %s133 = scalar_select %p130, %s131, %s132
    %p136 = pneg %p130
    %p137 = scmp.eq.s32.totalorder %s11, 1
    %p138 = por %p136, %p137
    %p139 = scmp.ne.s32.totalorder %s131, %s134
    %p140 = scmp.eq.s32.totalorder %s11, 0
    %p141 = por %p139, %p140
    %p142 = scmp.ne.s32.totalorder %s131, %s134
    %p143 = scmp.eq.s32.totalorder %s16, 1
    %p144 = por %p142, %p143
    %p145 = scmp.ne.s32.totalorder %s134, %s135
    %p146 = scmp.eq.s32.totalorder %s16, 0
    %p147 = por %p145, %p146
    %p148 = scmp.ne.s32.totalorder %s134, %s135
    %p149 = scmp.eq.s32.totalorder %s17, 1
    %p150 = por %p148, %p149
    %p152 = scmp.ne.s32.totalorder %s135, %s151
    %p153 = scmp.eq.s32.totalorder %s17, 0
    %p154 = por %p152, %p153
    %p155 = scmp.le.s32.totalorder 1, %s11
    %p156 = scmp.lt.s32.totalorder %s11, 3
    %p157 = pnand %p155, %p156
    %p158 = pneg %p157
    // Predicated region
    $region9: #{unet_block_innermost.1} parent=5 // pred_check
      _
    $region10: #{unet_block_innermost.1} parent=5 // pred_check_branch
      %160 = sbr.rel (%p157) target = $region12
    $region11: #{unet_block_innermost.1} parent=5 // pred_region
      %s161 = ssub.s32 %s11, 1
      // Predicated region
      $region13: #{unet_block_innermost.1} parent=11 // pred_check
        %p162 = pneg %p58
      $region14: #{unet_block_innermost.1} parent=11 // pred_check_branch
        %164 = sbr.rel (%p162) target = $region16
      $region15: #{unet_block_innermost.1} parent=11 // pred_region
        _
      $region16: #{unet_block_innermost.1} parent=11 // pred_fallthru
        _
      // Predicated region
      $region17: #{unet_block_innermost.1} parent=11 // pred_check
        %p165 = pneg %p79
      $region18: #{unet_block_innermost.1} parent=11 // pred_check_branch
        %167 = sbr.rel (%p165) target = $region20
      $region19: #{unet_block_innermost.1} parent=11 // pred_region
        _
      $region20: #{unet_block_innermost.1} parent=11 // pred_fallthru
        _
      // Predicated region
      $region21: #{unet_block_innermost.1} parent=11 // pred_check
        %p168 = pneg %p100
      $region22: #{unet_block_innermost.1} parent=11 // pred_check_branch
        %170 = sbr.rel (%p168) target = $region24
      $region23: #{unet_block_innermost.1} parent=11 // pred_region
        _
      $region24: #{unet_block_innermost.1} parent=11 // pred_fallthru
        _
      // Predicated region
      $region25: #{unet_block_innermost.1} parent=11 // pred_check
        %p171 = pneg %p121
      $region26: #{unet_block_innermost.1} parent=11 // pred_check_branch
        %173 = sbr.rel (%p171) target = $region28
      $region27: #{unet_block_innermost.1} parent=11 // pred_region
        _
      $region28: #{unet_block_innermost.1} parent=11 // pred_fallthru
        _
    $region12: #{unet_block_innermost.1} parent=5 // pred_fallthru
      _
    %p174 = scmp.lt.s32.totalorder %s11, 2
    // Predicated region
    $region29: #{unet_block_innermost.1} parent=5 // pred_check
      %p175 = pneg %p174
    $region30: #{unet_block_innermost.1} parent=5 // pred_check_branch
      %177 = sbr.rel (%p175) target = $region32
    $region31: #{unet_block_innermost.1} parent=5 // pred_region
      // Predicated region
      $region33: #{unet_block_innermost.1} parent=31 // pred_check
        %p178 = pneg %p31
      $region34: #{unet_block_innermost.1} parent=31 // pred_check_branch
        %180 = sbr.rel (%p178) target = $region36
      $region35: #{unet_block_innermost.1} parent=31 // pred_region
        %p181 = scmp.lt.s32.totalorder %s11, 1
        %s182 = scalar_select %p181, %s11, 1
        %s183 = smul.addr %s182, 2
        %s184 = smul.addr %s183, 8
        %s185 = scalar_lea.vmem %s0, %s184
      $region36: #{unet_block_innermost.1} parent=31 // pred_fallthru
        _
    $region32: #{unet_block_innermost.1} parent=5 // pred_fallthru
      _
    %p186 = scmp.le.s32.totalorder 1, %s11
    %p187 = scmp.lt.s32.totalorder %s11, 3
    %p188 = pnand %p186, %p187
    %p189 = pneg %p188
    // Predicated region
    $region37: #{unet_block_innermost.1} parent=5 // pred_check
      _
    $region38: #{unet_block_innermost.1} parent=5 // pred_check_branch
      %191 = sbr.rel (%p188) target = $region40
    $region39: #{unet_block_innermost.1} parent=5 // pred_region
      %s192 = ssub.s32 %s11, 1
      %p193 = scmp.lt.s32.totalorder %s16, 1
      %s194 = scalar_select %p193, %s16, 1
      %s195 = smul.addr %s194, 2
      %s196 = smul.addr %s195, 8
      %s197 = scalar_lea.vmem %s0, %s196
      %p198 = pneg %p37
      %p199 = pneg %p34
      %p200 = pneg %p58
      %p201 = pneg %p55
      %p202 = pneg %p79
      %p203 = pneg %p76
      %p204 = pneg %p100
      %p205 = pneg %p97
      %p206 = pneg %p121
      %p207 = pneg %p118
      %p208 = pneg %p147
      %p209 = pneg %p144
      %p210 = scmp.lt.s32.totalorder %s16, 1
      %s211 = scalar_select %p210, %s16, 1
      %s212 = smul.addr %s211, 4
      %s213 = smul.addr %s212, 4
      %s214 = scalar_lea.vmem %s5, %s213
      %p215 = scmp.lt.s32.totalorder %s16, 1
      %s216 = scalar_select %p215, %s16, 1
      %s217 = smul.addr %s216, 2
      %s218 = smul.addr %s217, 8
      %s219 = scalar_lea.vmem %s0, %s218
      %p220 = scmp.lt.s32.totalorder %s16, 1
      %s221 = scalar_select %p220, %s16, 1
      %s222 = smul.addr %s221, 4
      %s223 = smul.addr %s222, 4
      %s224 = scalar_lea.vmem %s5, %s223
      %v226 = vld [vmem:[%s219] sm:$0xff]
      %v227 = vld [vmem:[%s219 + $0x8] sm:$0xff]
      %vm228 = vcmp.ge.f32.partialorder %v226, 0.0
      %vm229 = vcmp.ge.f32.partialorder %v227, 0.0
      %v230 = vmul.f32 %v226, 0.2
      %v231 = vmul.f32 %v227, 0.2
      %v232 = vsel %vm228, %v226, %v230
      %v233 = vsel %vm229, %v227, %v231
      %236 = vrot.lane.b32.xlu0 %v232, 127
      %v237 = vpop.permute.xlu0 %236
      %238 = vrot.lane.b32.xlu0 %v233, 127
      %v239 = vpop.permute.xlu0 %238
      %242 = vrot.lane.b32.xlu0 %v232, 119
      %v243 = vpop.permute.xlu0 %242
      %244 = vrot.lane.b32.xlu0 %v233, 119
      %v245 = vpop.permute.xlu0 %244
      %248 = vrot.lane.b32.xlu0 %v232, 118
      %v249 = vpop.permute.xlu0 %248
      %250 = vrot.lane.b32.xlu0 %v233, 118
      %v251 = vpop.permute.xlu0 %250
      %v254 = vpack.c.bf16 %v233, %v232
      %v255 = vpack.c.bf16 %v239, %v237
      %v256 = vpack.c.bf16 %v245, %v243
      %v257 = vpack.c.bf16 %v251, %v249
      %v258 = vld [vmem:[%s2] sm:$0xf]
      %vm259 = vcmask 523264
      %v261 = vsel %vm259, %v258, 0
      %263 = vmatpush.bf16.msra.mxu0 0
      %264 = vmatpush.bf16.msra.mxu0 0
      %265 = vmatpush.bf16.msra.mxu0 0
      %266 = vmatpush.bf16.msra.mxu0 0
      %267 = vmatpush.bf16.msra.mxu0 %v257
      %268 = vmatpush.bf16.msra.mxu0 %v256
      %269 = vmatpush.bf16.msra.mxu0 %v255
      %270 = vmatpush.bf16.msra.mxu0 %v254
      %271 = vmatmul.bf16.gmra.mxu0 %v261
      %v272 = vpop.f32.mrf.mxu0
      %v273 = vadd.f32 0.0, %v272
      %v274 = vpop.f32.mrf.mxu0
      %275 = vdwg.mxu0
      %v276 = vmax.f32 %v273, 0.0
      %v277 = vld [vmem:[%s1] sm:$0x1]
      %v279 = vperm.slane %v277, 0
      %v281 = vmul.f32 %v276, %v279
      %v282 = vld [vmem:[%s4] sm:$0xf]
      %284 = vrot.lane.b32.xlu0 %v281, 10
      %v285 = vpop.permute.xlu0 %284
      %287 = vrot.lane.b32.xlu0 %v281, 9
      %v288 = vpop.permute.xlu0 %287
      %290 = vrot.lane.b32.xlu0 %v281, 1
      %v291 = vpop.permute.xlu0 %290
      %v293 = vpack.c.bf16 %v288, %v285
      %v294 = vpack.c.bf16 %v281, %v291
      %v295 = vld [vmem:[%s3] sm:$0x3]
      %297 = vset.pattern.permute.xlu0 0
      %298 = vperm.xlu0 %297, %v282
      %v299 = vpop.permute.xlu0 %298
      %vm301 = vcmask 261120
      %v303 = vsel %vm301, %v295, 0
      %305 = vmatpush.bf16.msra.mxu0 0
      %306 = vmatpush.bf16.msra.mxu0 0
      %307 = vmatpush.bf16.msra.mxu0 0
      %308 = vmatpush.bf16.msra.mxu0 0
      %309 = vmatpush.bf16.msra.mxu0 0
      %310 = vmatpush.bf16.msra.mxu0 0
      %311 = vmatpush.bf16.msra.mxu0 %v294
      %312 = vmatpush.bf16.msra.mxu0 %v293
      %313 = vmatmul.bf16.gmra.mxu0 %v303
      %v314 = vpop.f32.mrf.mxu0
      %v315 = vadd.f32 %v299, %v314
      %v316 = vpop.f32.mrf.mxu0
      %317 = vdwg.mxu0
      %318 = vst [vmem:[%s224] sm:$0xf] %v315
      %319 = vrot.lane.b32.xlu0 %v281, 8
      %v320 = vpop.permute.xlu0 %319
      %322 = vrot.lane.b32.xlu0 %v281, 127
      %v323 = vpop.permute.xlu0 %322
      %v325 = vpack.c.bf16 %v320, %v288
      %v326 = vpack.c.bf16 %v323, %v281
      %s327 = scalar_lea.vmem %s3, 2
      %v328 = vld [vmem:[%s327] sm:$0x3]
      %v330 = vsel %vm301, %v328, 0
      %332 = vmatpush.bf16.msra.mxu0 0
      %333 = vmatpush.bf16.msra.mxu0 0
      %334 = vmatpush.bf16.msra.mxu0 0
      %335 = vmatpush.bf16.msra.mxu0 0
      %336 = vmatpush.bf16.msra.mxu0 0
      %337 = vmatpush.bf16.msra.mxu0 0
      %338 = vmatpush.bf16.msra.mxu0 %v326
      %339 = vmatpush.bf16.msra.mxu0 %v325
      %340 = vmatmul.bf16.gmra.mxu0 %v330
      %v341 = vpop.f32.mrf.mxu0
      %v342 = vadd.f32 %v299, %v341
      %v343 = vpop.f32.mrf.mxu0
      %344 = vdwg.mxu0
      %s345 = scalar_lea.vmem %s224, 4
      %346 = vst [vmem:[%s345] sm:$0xf] %v342
      %347 = vrot.lane.b32.xlu0 %v281, 120
      %v348 = vpop.permute.xlu0 %347
      %350 = vrot.lane.b32.xlu0 %v281, 119
      %v351 = vpop.permute.xlu0 %350
      %v353 = vpack.c.bf16 %v351, %v348
      %s354 = scalar_lea.vmem %s3, 4
      %v355 = vld [vmem:[%s354] sm:$0x3]
      %v357 = vsel %vm301, %v355, 0
      %359 = vmatpush.bf16.msra.mxu0 0
      %360 = vmatpush.bf16.msra.mxu0 0
      %361 = vmatpush.bf16.msra.mxu0 0
      %362 = vmatpush.bf16.msra.mxu0 0
      %363 = vmatpush.bf16.msra.mxu0 0
      %364 = vmatpush.bf16.msra.mxu0 0
      %365 = vmatpush.bf16.msra.mxu0 %v353
      %366 = vmatpush.bf16.msra.mxu0 %v294
      %367 = vmatmul.bf16.gmra.mxu0 %v357
      %v368 = vpop.f32.mrf.mxu0
      %v369 = vadd.f32 %v299, %v368
      %v370 = vpop.f32.mrf.mxu0
      %371 = vdwg.mxu0
      %s372 = scalar_lea.vmem %s224, 8
      %373 = vst [vmem:[%s372] sm:$0xf] %v369
      %374 = vrot.lane.b32.xlu0 %v281, 118
      %v375 = vpop.permute.xlu0 %374
      %v377 = vpack.c.bf16 %v375, %v351
      %s378 = scalar_lea.vmem %s3, 6
      %v379 = vld [vmem:[%s378] sm:$0x3]
      %v381 = vsel %vm301, %v379, 0
      %383 = vmatpush.bf16.msra.mxu0 0
      %384 = vmatpush.bf16.msra.mxu0 0
      %385 = vmatpush.bf16.msra.mxu0 0
      %386 = vmatpush.bf16.msra.mxu0 0
      %387 = vmatpush.bf16.msra.mxu0 0
      %388 = vmatpush.bf16.msra.mxu0 0
      %389 = vmatpush.bf16.msra.mxu0 %v377
      %390 = vmatpush.bf16.msra.mxu0 %v326
      %391 = vmatmul.bf16.gmra.mxu0 %v381
      %v392 = vpop.f32.mrf.mxu0
      %v393 = vadd.f32 %v299, %v392
      %v394 = vpop.f32.mrf.mxu0
      %395 = vdwg.mxu0
      %s396 = scalar_lea.vmem %s224, 12
      %397 = vst [vmem:[%s396] sm:$0xf] %v393
      %p398 = scmp.lt.s32.totalorder %s16, 1
      %s399 = scalar_select %p398, %s16, 1
      %s400 = smul.addr %s399, 4
      %s401 = smul.addr %s400, 4
      %s402 = scalar_lea.vmem %s5, %s401
      // Predicated region
      $region41: #{unet_block_innermost.1} parent=39 // pred_check
        %p403 = pneg %p144
      $region42: #{unet_block_innermost.1} parent=39 // pred_check_branch
        %405 = sbr.rel (%p403) target = $region44
      $region43: #{unet_block_innermost.1} parent=39 // pred_region
        _
      $region44: #{unet_block_innermost.1} parent=39 // pred_fallthru
        _
    $region40: #{unet_block_innermost.1} parent=5 // pred_fallthru
      _
    %p406 = scmp.le.s32.totalorder 2, %s11
    // Predicated region
    $region45: #{unet_block_innermost.1} parent=5 // pred_check
      %p407 = pneg %p406
    $region46: #{unet_block_innermost.1} parent=5 // pred_check_branch
      %409 = sbr.rel (%p407) target = $region48
    $region47: #{unet_block_innermost.1} parent=5 // pred_region
      %s410 = ssub.s32 %s11, 2
      // Predicated region
      $region49: #{unet_block_innermost.1} parent=47 // pred_check
        %p411 = pneg %p150
      $region50: #{unet_block_innermost.1} parent=47 // pred_check_branch
        %413 = sbr.rel (%p411) target = $region52
      $region51: #{unet_block_innermost.1} parent=47 // pred_region
        %p414 = scmp.lt.s32.totalorder %s17, 1
        %s415 = scalar_select %p414, %s17, 1
        %s416 = smul.addr %s415, 4
        %s417 = smul.addr %s416, 4
        %s418 = scalar_lea.vmem %s5, %s417
      $region52: #{unet_block_innermost.1} parent=47 // pred_fallthru
        _
    $region48: #{unet_block_innermost.1} parent=5 // pred_fallthru
      _
  $region6: #{unet_block_innermost.1} parent=0 // loop_footer
    %s15 = sadd.s32 1, %s11
  $region7: #{unet_block_innermost.1} parent=0 // loop_footer_branch
    %10 = sbr.rel target = $region3
  $region8: #{unet_block_innermost.1} parent=0 // loop_exit
    _

</llo_original>
